<compile_context>
chip_gen: v7x
topology: tpu7x:2x2x1
jax: 0.10.0
libtpu: 0.0.40
codegen_flags: <defaults>
</compile_context>

<pallas_src>
import jax
import jax.numpy as jnp
from jax import lax
from jax.experimental import pallas as pl
from jax.experimental.pallas import tpu as pltpu


def _round_up(x: int, m: int) -> int:
    return ((x + m - 1) // m) * m


# ---------------------------------------------------------------------------
# Stage 1 (runs once, grid=(1,)): fold the rank-1 + rank-K projections and the
# predictor weight into an effective (N, Mp) bf16 weight:
#     W_eff = P^T diag(s) (P @ W_t),  P = [v_raw; V],  s = [1/||v_raw||^2, 1, ..., 1]
# ---------------------------------------------------------------------------
def _eca_fold_kernel(p_ref, wt_ref, weff_ref):
    p = p_ref[...]                                               # (K+1, N), row 0 = raw v
    v = p[0:1, :]                                                # (1, N)
    inv_n2 = 1.0 / jnp.sum(v * v)                                # 1 / ||v||^2

    pw = jnp.dot(p, wt_ref[...], preferred_element_type=jnp.float32)   # (K+1, Mp)
    row0 = lax.broadcasted_iota(jnp.int32, pw.shape, 0) == 0
    pw = jnp.where(row0, pw * inv_n2, pw)                        # scale only the v row

    weff = jnp.dot(p.T, pw, preferred_element_type=jnp.float32)  # (N, Mp)
    weff_ref[...] = weff.astype(weff_ref.dtype)                  # bf16 out


# ---------------------------------------------------------------------------
# Stage 2 (batch-tiled, "parallel" grid): out_tile = x_tile @ W_eff + b  (bf16 MXU,
# f32 accumulate).
# ---------------------------------------------------------------------------
def _eca_apply_kernel(x_ref, weff_ref, b_ref, out_ref):
    xb = x_ref[...].astype(jnp.bfloat16)                         # VPU cast, post-DMA
    out_ref[...] = (
        jnp.dot(xb, weff_ref[...], preferred_element_type=jnp.float32) + b_ref[...]
    )


def _choose_batch_tile(B: int, N: int, Mp: int):
    """Pick the batch tile and an explicit VMEM limit for stage 2."""
    # Resident VMEM: W_eff (bf16, single-buffered) + bias (f32, single-buffered).
    fixed = N * Mp * 2 + Mp * 4
    # Per batch-row: x (f32) and out (f32) tiles, each double-buffered.
    per_row = 2 * (N * 4) + 2 * (Mp * 4)
    budget = 28 * 1024 * 1024            # safe vs v5e/v6e/v7x scoped-VMEM defaults

    if B <= 16:
        tb = B                           # single full-batch tile (block == full dim)
    else:
        tb_cores = _round_up(pl.cdiv(B, 2), 16)        # >=2 tiles -> both v7x TCs busy
        tb_vmem = max(16, ((budget - fixed) // per_row) // 16 * 16)
        tb = max(16, min(512, tb_cores, tb_vmem))

    needed = fixed + tb * per_row
    vmem_limit = int(max(min(2 * needed, 48 << 20), needed + (2 << 20), 16 << 20))
    return tb, vmem_limit


def eca_forward(x, v_raw, V, W, b):
    """Pallas implementation of ECA.forward with a Linear predictor.

    x: (B, N), v_raw: (1, N) unnormalized, V: (K, N) found components (K may be 0),
    W: (M, N), b: (M,).  Returns (B, M) float32.
    """
    if x.dtype != jnp.float32:
        x = x.astype(jnp.float32)
    B, N = x.shape
    M = W.shape[0]
    Mp = _round_up(max(M, 1), 128)       # lane-dense predictor output dim
    Kp1 = V.shape[0] + 1

    # Wrapper-side (one-time, tiny) prep: P = [v_raw; V], padded W^T, padded bias.
    P_raw = jnp.concatenate(
        [v_raw.astype(jnp.float32), V.astype(jnp.float32)], axis=0)          # (K+1, N)
    W_t = jnp.zeros((N, Mp), jnp.float32).at[:, :M].set(W.astype(jnp.float32).T)
    b_pad = jnp.zeros((1, Mp), jnp.float32).at[:, :M].set(
        b.astype(jnp.float32).reshape(1, M))

    # ---- Stage 1: effective weight, emitted in bf16 (single grid step). ----
    w_eff = pl.pallas_call(
        _eca_fold_kernel,
        out_shape=jax.ShapeDtypeStruct((N, Mp), jnp.bfloat16),
        grid=(1,),
        in_specs=[
            pl.BlockSpec((Kp1, N), lambda i: (0, 0)),
            pl.BlockSpec((N, Mp), lambda i: (0, 0)),
        ],
        out_specs=pl.BlockSpec((N, Mp), lambda i: (0, 0)),
    )(P_raw, W_t)

    # ---- Stage 2: batch-tiled linear layer (bf16 MXU, f32 accumulate). ----
    TB, vmem_limit = _choose_batch_tile(B, N, Mp)
    grid = (pl.cdiv(B, TB),)             # ragged last block handled by Pallas masking

    out = pl.pallas_call(
        _eca_apply_kernel,
        out_shape=jax.ShapeDtypeStruct((B, Mp), jnp.float32),
        grid=grid,
        in_specs=[
            pl.BlockSpec((TB, N), lambda i: (i, 0)),                 # x tile (pipelined)
            pl.BlockSpec((N, Mp), lambda i: (0, 0),
                         pipeline_mode=pl.Buffered(1)),              # W_eff resident
            pl.BlockSpec((1, Mp), lambda i: (0, 0),
                         pipeline_mode=pl.Buffered(1)),              # bias resident
        ],
        out_specs=pl.BlockSpec((TB, Mp), lambda i: (i, 0)),
        compiler_params=pltpu.CompilerParams(
            dimension_semantics=("parallel",),
            vmem_limit_bytes=vmem_limit,
        ),
    )(x, w_eff, b_pad)

    return out[:, :M]


def eca_forward_ref(x, v_raw, V, W, b):
    """Pure-JAX f32 reference (mirrors the PyTorch forward exactly)."""
    v = v_raw / jnp.linalg.norm(v_raw)
    proj = x @ v.T @ v
    if V.shape[0] > 0:
        proj = proj + (x @ V.T) @ V
    return proj @ W.T + b[None, :]


if __name__ == "__main__":
    B, N, M, K = 8, 32, 16, 2  # batch, X-features, Y-features, already-found components

    key = jax.random.PRNGKey(0)
    kx, kv, kV, kw, kb, kx2 = jax.random.split(key, 6)

    x = jax.random.normal(kx, (B, N), dtype=jnp.float32)
    # _v initialized like xavier_normal_ on a (1, N) tensor (deterministic via PRNGKey)
    v_raw = jax.random.normal(kv, (1, N), dtype=jnp.float32) * jnp.sqrt(2.0 / (1 + N))
    # V: K previously-found (row) components — orthonormalized for realism
    V_rand = jax.random.normal(kV, (K, N), dtype=jnp.float32)
    Q, _ = jnp.linalg.qr(V_rand.T)
    V = Q.T[:K].astype(jnp.float32)
    # predictor = Linear(N, M), deterministic init
    W = jax.random.normal(kw, (M, N), dtype=jnp.float32) * (1.0 / jnp.sqrt(N))
    b = jax.random.normal(kb, (M,), dtype=jnp.float32) * 0.01

    # bf16 hot path -> compare against the f32 reference at bf16-appropriate tolerance.
    TOL = dict(atol=3e-2, rtol=3e-2)

    # n_calc > 0 branch
    out = jax.block_until_ready(eca_forward(x, v_raw, V, W, b))
    ref = eca_forward_ref(x, v_raw, V, W, b)
    assert out.shape == (B, M)
    assert jnp.allclose(out, ref, **TOL), "mismatch vs reference (K>0)"

    # n_calc == 0 branch
    V0 = jnp.zeros((0, N), dtype=jnp.float32)
    out0 = jax.block_until_ready(eca_forward(x, v_raw, V0, W, b))
    ref0 = eca_forward_ref(x, v_raw, V0, W, b)
    assert jnp.allclose(out0, ref0, **TOL), "mismatch vs reference (K=0)"

    # larger batch: exercises multi-tile grid + ragged (masked) last block, no x padding
    B2 = 40
    x2 = jax.random.normal(kx2, (B2, N), dtype=jnp.float32)
    out2 = jax.block_until_ready(eca_forward(x2, v_raw, V, W, b))
    ref2 = eca_forward_ref(x2, v_raw, V, W, b)
    assert out2.shape == (B2, M)
    assert jnp.allclose(out2, ref2, **TOL), "mismatch vs reference (multi-tile/ragged)"

    # TODO(synk): ECA.fit / inverse / reconstruct are host-side Adam training loops over an
    # arbitrary torch predictor; only the forward pass is expressed as Pallas kernels here.
    print("KERNEL_OK")
</pallas_src>

<mosaic_0001>
module attributes {stable_mosaic.version = 11 : i64} {
  func.func @_eca_fold_kernel(%arg0: i32, %arg1: memref<3x32xf32, #tpu.memory_space<vmem>>, %arg2: memref<32x128xf32, #tpu.memory_space<vmem>>, %arg3: memref<32x128xbf16, #tpu.memory_space<vmem>>) attributes {dimension_semantics = [#tpu.dimension_semantics<arbitrary>], iteration_bounds = array<i64: 1>, scalar_prefetch = 0 : i64, scratch_operands = 0 : i64, tpu.core_type = #tpu.core_type<tc>, window_params = [{pipeline_mode = #tpu.pipeline_mode<synchronous>, transform_indices = @transform_0, window_bounds = array<i64: 3, 32>}, {pipeline_mode = #tpu.pipeline_mode<synchronous>, transform_indices = @transform_1, window_bounds = array<i64: 32, 128>}, {pipeline_mode = #tpu.pipeline_mode<synchronous>, transform_indices = @transform_2, window_bounds = array<i64: 32, 128>}]} {
    %c0 = arith.constant 0 : index
    %c0_0 = arith.constant 0 : index
    %0 = vector.load %arg1[%c0, %c0_0] : memref<3x32xf32, #tpu.memory_space<vmem>>, vector<3x32xf32>
    %1 = vector.extract_strided_slice %0 {offsets = [0, 0], sizes = [1, 32], strides = [1, 1]} : vector<3x32xf32> to vector<1x32xf32>
    %2 = arith.mulf %1, %1 : vector<1x32xf32>
    %3 = vector.shape_cast %2 : vector<1x32xf32> to vector<1x1x32xf32>
    %cst = arith.constant dense<0.000000e+00> : vector<1xf32>
    %4 = vector.multi_reduction <add>, %3, %cst [1, 2] : vector<1x1x32xf32> to vector<1xf32>
    %5 = vector.shape_cast %4 : vector<1xf32> to vector<1x1x1xf32>
    %6 = vector.extract %5[0, 0, 0] : f32 from vector<1x1x1xf32>
    %cst_1 = arith.constant 1.000000e+00 : f32
    %7 = arith.divf %cst_1, %6 : f32
    %c0_2 = arith.constant 0 : index
    %c0_3 = arith.constant 0 : index
    %8 = vector.load %arg2[%c0_2, %c0_3] : memref<32x128xf32, #tpu.memory_space<vmem>>, vector<32x128xf32>
    %cst_4 = arith.constant dense<0.000000e+00> : vector<3x128xf32>
    %9 = tpu.matmul %0, %8, %cst_4 {dimension_numbers = #tpu.dot_dimension_numbers<[1], [0], [0], [1], [0, 0, 1, 1], [], []>} : vector<3x32xf32>, vector<32x128xf32>, vector<3x128xf32> -> vector<3x128xf32>
    %10 = tpu.iota {dimensions = array<i32: 0>} : vector<3x128xi32>
    %c0_i32 = arith.constant 0 : i32
    %11 = vector.broadcast %c0_i32 : i32 to vector<3x128xi32>
    %12 = arith.cmpi eq, %10, %11 : vector<3x128xi32>
    %13 = vector.broadcast %7 : f32 to vector<3x128xf32>
    %14 = arith.mulf %9, %13 : vector<3x128xf32>
    %15 = arith.select %12, %14, %9 : vector<3x128xi1>, vector<3x128xf32>
    %16 = tpu.transpose %0, [1, 0] : vector<3x32xf32> -> vector<32x3xf32>
    %cst_5 = arith.constant dense<0.000000e+00> : vector<32x128xf32>
    %17 = tpu.matmul %16, %15, %cst_5 {dimension_numbers = #tpu.dot_dimension_numbers<[1], [0], [0], [1], [0, 0, 1, 1], [], []>} : vector<32x3xf32>, vector<3x128xf32>, vector<32x128xf32> -> vector<32x128xf32>
    %18 = arith.truncf %17 : vector<32x128xf32> to vector<32x128xbf16>
    %c0_6 = arith.constant 0 : index
    %c0_7 = arith.constant 0 : index
    %19 = vector.load %arg3[%c0_6, %c0_7] : memref<32x128xbf16, #tpu.memory_space<vmem>>, vector<32x128xbf16>
    tpu.vector_store %arg3[%c0_6, %c0_7], %18 {strides = array<i32>} : memref<32x128xbf16, #tpu.memory_space<vmem>>, vector<32x128xbf16>,
    return
  }
  func.func @transform_0(%arg0: i32) -> (i32, i32) {
    %c0_i32 = arith.constant 0 : i32
    %c0_i32_0 = arith.constant 0 : i32
    %c0_i32_1 = arith.constant 0 : i32
    return %c0_i32, %c0_i32_0 : i32, i32
  }
  func.func @transform_1(%arg0: i32) -> (i32, i32) {
    %c0_i32 = arith.constant 0 : i32
    %c0_i32_0 = arith.constant 0 : i32
    %c0_i32_1 = arith.constant 0 : i32
    return %c0_i32, %c0_i32_0 : i32, i32
  }
  func.func @transform_2(%arg0: i32) -> (i32, i32) {
    %c0_i32 = arith.constant 0 : i32
    %c0_i32_0 = arith.constant 0 : i32
    %c0_i32_1 = arith.constant 0 : i32
    return %c0_i32, %c0_i32_0 : i32, i32
  }
}

</mosaic_0001>

<llo_original>
// kernel: tpu_custom_call.1
$region0: #{tpu_custom_call.1}
  #allocation0 [shape = 'u32[]', space=smem, size = 0x4, offset = 0x4, fixed_abs, tag = 'smem constant byte address 0x4 - core index']
  #allocation1 [shape = 'u32[144,128]{1,0:T(1,128)}', space=vmem, size = 0x12000, scoped, tag = 'internal scratch']
  %s0 = inlined_call_operand.hbm [shape: f32[3,32], index: 0, kind: input, shape index: {}]
  %s1 = inlined_call_operand.hbm [shape: f32[32,128], index: 1, kind: input, shape index: {}]
  %s2 = inlined_call_operand.hbm [shape: bf16[32,128], index: 2, kind: output, shape index: {}]
  %s3 = sld [smem:[#allocation0]]
  $region26: #{tpu_custom_call.1} parent=0
    _
  %s5 = ssub.s32 1, %s3
  %s6 = scalar_select 0, %s5, %s3
  $region1: #{tpu_custom_call.1} parent=0
    #allocation2 [shape = 'u8[2048]{0}', space=vmem, size = 0x800, scoped, tag = 'input window, operand 0, single buffered']
    #allocation3 [shape = 's32[1]{0}', space=sflag, size = 0x4, scoped, tag = 'scoped memory for tpu_custom_call.1']
    #allocation4 [shape = 's32[1]{0}', space=sflag, size = 0x4, scoped, tag = 'scoped memory for tpu_custom_call.1']
    #allocation5 [shape = 'u8[16384]{0}', space=vmem, size = 0x4000, scoped, tag = 'input window, operand 1, single buffered']
    #allocation6 [shape = 's32[1]{0}', space=sflag, size = 0x4, scoped, tag = 'scoped memory for tpu_custom_call.1']
    #allocation7 [shape = 'u8[8192]{0}', space=vmem, size = 0x2000, scoped, tag = 'output window, operand 0, single buffered']
    %7 = vsyncpa [#allocation3], 0
    %8 = vsyncpa [#allocation6], 0
    %9 = vsyncpa [#allocation4], 0
    // Predicated region
    $region2: #{tpu_custom_call.1} parent=1 // pred_check
      _
    $region3: #{tpu_custom_call.1} parent=1 // pred_check_branch
      %11 = sbr.rel (0) target = $region5
    $region4: #{tpu_custom_call.1} parent=1 // pred_region
      %s13 = ssub.s32 64, 64
      %14 = vsyncadd [#allocation3], %s13
      %s16 = sshll.u32 [#allocation2], 4
      %s17 = int_to_ptr.vmem [resolvable:$true] %s16
      %19 = dma.hbm_to_vmem [thread:$0]  %s0, 64, %s17, [#allocation3]
    $region5: #{tpu_custom_call.1} parent=1 // pred_fallthru
      _
    // Predicated region
    $region6: #{tpu_custom_call.1} parent=1 // pred_check
      _
    $region7: #{tpu_custom_call.1} parent=1 // pred_check_branch
      %21 = sbr.rel (0) target = $region9
    $region8: #{tpu_custom_call.1} parent=1 // pred_region
      %s23 = ssub.s32 512, 512
      %24 = vsyncadd [#allocation6], %s23
      %s25 = sshll.u32 [#allocation5], 4
      %s26 = int_to_ptr.vmem [resolvable:$true] %s25
      %31 = dma.hbm_to_vmem [thread:$0]  %s1, 512, %s26, [#allocation6], 128, 128, 8
    $region9: #{tpu_custom_call.1} parent=1 // pred_fallthru
      _
    // Predicated region
    $region10: #{tpu_custom_call.1} parent=1 // pred_check
      _
    $region11: #{tpu_custom_call.1} parent=1 // pred_check_branch
      %33 = sbr.rel (0) target = $region13
    $region12: #{tpu_custom_call.1} parent=1 // pred_region
      %34 = dma.done [#allocation3], 64
    $region13: #{tpu_custom_call.1} parent=1 // pred_fallthru
      _
    // Predicated region
    $region14: #{tpu_custom_call.1} parent=1 // pred_check
      _
    $region15: #{tpu_custom_call.1} parent=1 // pred_check_branch
      %36 = sbr.rel (0) target = $region17
    $region16: #{tpu_custom_call.1} parent=1 // pred_region
      %37 = dma.done [#allocation6], 512
    $region17: #{tpu_custom_call.1} parent=1 // pred_fallthru
      _
    %v38 = vld [vmem:[#allocation2] sm:$0x7]
    %v39 = vmul.f32 %v38, %v38
    %vm40 = vcmask 253952
    %v41 = vsel %vm40, %v39, 0.0
    %42 = vadd.xlane.f32.xlu0 %v41
    %v43 = vpop.xlane.xlu0 %42
    %v44 = vrot.slane %v43, 4
    %v45 = vadd.f32 %v43, %v44
    %v46 = vrot.slane %v45, 2
    %v47 = vadd.f32 %v45, %v46
    %v48 = vrot.slane %v47, 1
    %v49 = vadd.f32 %v47, %v48
    %s50 = vtos %v49
    %v51 = vstv %s50
    %v52 = vrcp.pop %v51
    %s53 = vtos %v52
    %v54 = vld [vmem:[#allocation5] sm:$0xff]
    %v55 = vld [vmem:[#allocation5 + $0x8] sm:$0xff]
    %v56 = vld [vmem:[#allocation5 + $0x10] sm:$0xff]
    %v57 = vld [vmem:[#allocation5 + $0x18] sm:$0xff]
    %vm58 = vcmask 261120
    %v60 = vsel %vm58, %v38, 0
    %62 = vmatprep.subr.mxu0 0.0
    %63 = vmatpush1.msra.mxu0 %v54
    %64 = vmatprep.subr.mxu0 0.0
    %65 = vmatpush1.msra.mxu0 %v55
    %66 = vmatprep.subr.mxu0 0.0
    %67 = vmatpush1.msra.mxu0 %v56
    %68 = vmatprep.subr.mxu0 0.0
    %69 = vmatpush1.msra.mxu0 %v57
    %70 = vmatprep.subr.mxu0 0.0
    %71 = vmatpush1.msra.mxu0 0.0
    %72 = vmatprep.subr.mxu0 0.0
    %73 = vmatpush1.msra.mxu0 0.0
    %74 = vmatprep.subr.mxu0 0.0
    %75 = vmatpush1.msra.mxu0 0.0
    %76 = vmatprep.subr.mxu0 0.0
    %77 = vmatpush1.msra.mxu0 0.0
    %78 = vmatprep.subr.mxu0 0.0
    %79 = vmatpush1.msra.mxu0 0.0
    %80 = vmatprep.subr.mxu0 0.0
    %81 = vmatpush1.msra.mxu0 0.0
    %82 = vmatprep.subr.mxu0 0.0
    %83 = vmatpush1.msra.mxu0 0.0
    %84 = vmatprep.subr.mxu0 0.0
    %85 = vmatpush1.msra.mxu0 0.0
    %86 = vmatprep.subr.mxu0 0.0
    %87 = vmatpush1.msra.mxu0 0.0
    %88 = vmatprep.subr.mxu0 0.0
    %89 = vmatpush1.msra.mxu0 0.0
    %90 = vmatprep.subr.mxu0 0.0
    %91 = vmatpush1.msra.mxu0 0.0
    %92 = vmatprep.subr.mxu0 0.0
    %93 = vmatpush1.msra.mxu0 0.0
    %94 = vmatprep.subr.mxu0 0.0
    %95 = vmatpush1.msra.mxu0 0.0
    %96 = vmatprep.subr.mxu0 0.0
    %97 = vmatpush1.msra.mxu0 0.0
    %98 = vmatprep.subr.mxu0 0.0
    %99 = vmatpush1.msra.mxu0 0.0
    %100 = vmatprep.subr.mxu0 0.0
    %101 = vmatpush1.msra.mxu0 0.0
    %102 = vmatprep.subr.mxu0 0.0
    %103 = vmatpush1.msra.mxu0 0.0
    %104 = vmatprep.subr.mxu0 0.0
    %105 = vmatpush1.msra.mxu0 0.0
    %106 = vmatprep.subr.mxu0 0.0
    %107 = vmatpush1.msra.mxu0 0.0
    %108 = vmatprep.subr.mxu0 0.0
    %109 = vmatpush1.msra.mxu0 0.0
    %110 = vmatprep.subr.mxu0 0.0
    %111 = vmatpush1.msra.mxu0 0.0
    %112 = vmatprep.subr.mxu0 0.0
    %113 = vmatpush1.msra.mxu0 0.0
    %114 = vmatprep.subr.mxu0 0.0
    %115 = vmatpush1.msra.mxu0 0.0
    %116 = vmatprep.subr.mxu0 0.0
    %117 = vmatpush1.msra.mxu0 0.0
    %118 = vmatprep.subr.mxu0 0.0
    %119 = vmatpush1.msra.mxu0 0.0
    %120 = vmatprep.subr.mxu0 0.0
    %121 = vmatpush1.msra.mxu0 0.0
    %122 = vmatprep.subr.mxu0 0.0
    %123 = vmatpush1.msra.mxu0 0.0
    %124 = vmatprep.subr.mxu0 0.0
    %125 = vmatpush1.msra.mxu0 0.0
    %126 = vmatprep.mubr.f32.mxu0 0.0
    %127 = vmatmul.mubr.f32.gmra.mrb[0].mxu0 %v60
    %v128 = vpop.f32.mrb[0].mxu0
    %v129 = vadd.f32 0.0, %v128
    %v130 = vpop.f32.mrb[0].mxu0
    %131 = vdwg.mxu0
    %v132 = vlaneseq
    %v133 = vshrl.u32 %v132, 7
    %vm134 = vcmp.eq.s32.totalorder %v133, 0
    %v135 = vstv %s53
    %v136 = vmul.f32 %v129, %v135
    %v137 = vsel %vm134, %v136, %v129
    %138 = vxpose.xlu0.b32.start [1/16] %v38, 128
    %139 = vxpose.xlu0.b32.cont [2/16] 0.0, 128
    %140 = vxpose.xlu0.b32.cont [3/16] 0.0, 128
    %141 = vxpose.xlu0.b32.cont [4/16] 0.0, 128
    %142 = vxpose.xlu0.b32.cont [5/16] 0.0, 128
    %143 = vxpose.xlu0.b32.cont [6/16] 0.0, 128
    %144 = vxpose.xlu0.b32.cont [7/16] 0.0, 128
    %145 = vxpose.xlu0.b32.cont [8/16] 0.0, 128
    %146 = vxpose.xlu0.b32.cont [9/16] 0.0, 128
    %147 = vxpose.xlu0.b32.cont [10/16] 0.0, 128
    %148 = vxpose.xlu0.b32.cont [11/16] 0.0, 128
    %149 = vxpose.xlu0.b32.cont [12/16] 0.0, 128
    %150 = vxpose.xlu0.b32.cont [13/16] 0.0, 128
    %151 = vxpose.xlu0.b32.cont [14/16] 0.0, 128
    %152 = vxpose.xlu0.b32.cont [15/16] 0.0, 128
    %153 = vxpose.xlu0.b32.end [16/16] 0.0, 128
    %v154 = vpop.trf.xlu0
    %v155 = vpop.trf.xlu0
    %v156 = vpop.trf.xlu0
    %v157 = vpop.trf.xlu0
    %v158 = vpop.trf.xlu0
    %v159 = vpop.trf.xlu0
    %v160 = vpop.trf.xlu0
    %v161 = vpop.trf.xlu0
    %v162 = vpop.trf.xlu0
    %v163 = vpop.trf.xlu0
    %v164 = vpop.trf.xlu0
    %v165 = vpop.trf.xlu0
    %v166 = vpop.trf.xlu0
    %v167 = vpop.trf.xlu0
    %v168 = vpop.trf.xlu0
    %v169 = vpop.trf.xlu0
    %vm170 = vcmask 23552
    %v172 = vsel %vm170, %v154, 0
    %v175 = vsel %vm170, %v155, 0
    %v178 = vsel %vm170, %v156, 0
    %v181 = vsel %vm170, %v157, 0
    %vm183 = vcmask 1042432
    %v185 = vsel %vm183, %v137, 0
    %187 = vmatprep.subr.mxu0 0.0
    %188 = vmatpush1.msra.mxu0 %v185
    %189 = vmatprep.subr.mxu0 0.0
    %190 = vmatpush1.msra.mxu0 0.0
    %191 = vmatprep.subr.mxu0 0.0
    %192 = vmatpush1.msra.mxu0 0.0
    %193 = vmatprep.subr.mxu0 0.0
    %194 = vmatpush1.msra.mxu0 0.0
    %195 = vmatprep.subr.mxu0 0.0
    %196 = vmatpush1.msra.mxu0 0.0
    %197 = vmatprep.subr.mxu0 0.0
    %198 = vmatpush1.msra.mxu0 0.0
    %199 = vmatprep.subr.mxu0 0.0
    %200 = vmatpush1.msra.mxu0 0.0
    %201 = vmatprep.subr.mxu0 0.0
    %202 = vmatpush1.msra.mxu0 0.0
    %203 = vmatprep.subr.mxu0 0.0
    %204 = vmatpush1.msra.mxu0 0.0
    %205 = vmatprep.subr.mxu0 0.0
    %206 = vmatpush1.msra.mxu0 0.0
    %207 = vmatprep.subr.mxu0 0.0
    %208 = vmatpush1.msra.mxu0 0.0
    %209 = vmatprep.subr.mxu0 0.0
    %210 = vmatpush1.msra.mxu0 0.0
    %211 = vmatprep.subr.mxu0 0.0
    %212 = vmatpush1.msra.mxu0 0.0
    %213 = vmatprep.subr.mxu0 0.0
    %214 = vmatpush1.msra.mxu0 0.0
    %215 = vmatprep.subr.mxu0 0.0
    %216 = vmatpush1.msra.mxu0 0.0
    %217 = vmatprep.subr.mxu0 0.0
    %218 = vmatpush1.msra.mxu0 0.0
    %219 = vmatprep.subr.mxu0 0.0
    %220 = vmatpush1.msra.mxu0 0.0
    %221 = vmatprep.subr.mxu0 0.0
    %222 = vmatpush1.msra.mxu0 0.0
    %223 = vmatprep.subr.mxu0 0.0
    %224 = vmatpush1.msra.mxu0 0.0
    %225 = vmatprep.subr.mxu0 0.0
    %226 = vmatpush1.msra.mxu0 0.0
    %227 = vmatprep.subr.mxu0 0.0
    %228 = vmatpush1.msra.mxu0 0.0
    %229 = vmatprep.subr.mxu0 0.0
    %230 = vmatpush1.msra.mxu0 0.0
    %231 = vmatprep.subr.mxu0 0.0
    %232 = vmatpush1.msra.mxu0 0.0
    %233 = vmatprep.subr.mxu0 0.0
    %234 = vmatpush1.msra.mxu0 0.0
    %235 = vmatprep.subr.mxu0 0.0
    %236 = vmatpush1.msra.mxu0 0.0
    %237 = vmatprep.subr.mxu0 0.0
    %238 = vmatpush1.msra.mxu0 0.0
    %239 = vmatprep.subr.mxu0 0.0
    %240 = vmatpush1.msra.mxu0 0.0
    %241 = vmatprep.subr.mxu0 0.0
    %242 = vmatpush1.msra.mxu0 0.0
    %243 = vmatprep.subr.mxu0 0.0
    %244 = vmatpush1.msra.mxu0 0.0
    %245 = vmatprep.subr.mxu0 0.0
    %246 = vmatpush1.msra.mxu0 0.0
    %247 = vmatprep.subr.mxu0 0.0
    %248 = vmatpush1.msra.mxu0 0.0
    %249 = vmatprep.subr.mxu0 0.0
    %250 = vmatpush1.msra.mxu0 0.0
    %251 = vmatprep.mubr.f32.mxu0 0.0
    %252 = vmatmul.mubr.f32.gmra.mrb[0].mxu0 %v172
    %v253 = vpop.f32.mrb[0].mxu0
    %v254 = vadd.f32 0.0, %v253
    %v255 = vpop.f32.mrb[0].mxu0
    %256 = vmatprep.mubr.f32.mxu0 0.0
    %257 = vmatmul.mubr.f32.gmra.mrb[0].mxu0 %v175
    %v258 = vpop.f32.mrb[0].mxu0
    %v259 = vadd.f32 0.0, %v258
    %v260 = vpop.f32.mrb[0].mxu0
    %261 = vmatprep.mubr.f32.mxu0 0.0
    %262 = vmatmul.mubr.f32.gmra.mrb[0].mxu0 %v178
    %v263 = vpop.f32.mrb[0].mxu0
    %v264 = vadd.f32 0.0, %v263
    %v265 = vpop.f32.mrb[0].mxu0
    %266 = vmatprep.mubr.f32.mxu0 0.0
    %267 = vmatmul.mubr.f32.gmra.mrb[0].mxu0 %v181
    %v268 = vpop.f32.mrb[0].mxu0
    %v269 = vadd.f32 0.0, %v268
    %v270 = vpop.f32.mrb[0].mxu0
    %271 = vdwg.mxu0
    %v272 = vpack.c.bf16 %v259, %v254
    %v273 = vpack.c.bf16 %v269, %v264
    %v276 = vunpack.c.l.b16 %v272
    %v277 = vunpack.c.h.b16 %v272
    %v278 = vunpack.c.l.b16 %v273
    %v279 = vunpack.c.h.b16 %v273
    %v280 = vpack.c.b16 %v276, %v276
    %v281 = vpack.c.b16 %v277, %v277
    %v282 = vpack.c.b16 %v278, %v278
    %v283 = vpack.c.b16 %v279, %v279
    %288 = vst [vmem:[#allocation7] sm:$0xf] %v280
    %289 = vst [vmem:[#allocation7 + $0x4] sm:$0xf] %v281
    %290 = vst [vmem:[#allocation7 + $0x8] sm:$0xf] %v282
    %291 = vst [vmem:[#allocation7 + $0xc] sm:$0xf] %v283
    // Predicated region
    $region18: #{tpu_custom_call.1} parent=1 // pred_check
      _
    $region19: #{tpu_custom_call.1} parent=1 // pred_check_branch
      %293 = sbr.rel (0) target = $region21
    $region20: #{tpu_custom_call.1} parent=1 // pred_region
      %s295 = ssub.s32 256, 256
      %296 = vsyncadd [#allocation4], %s295
      %s297 = sshll.u32 [#allocation7], 4
      %s298 = int_to_ptr.vmem [resolvable:$true] %s297
      %303 = dma.vmem_to_hbm [thread:$0]  %s298, 256, %s2, [#allocation4], 64, 64, 4
    $region21: #{tpu_custom_call.1} parent=1 // pred_fallthru
      _
    // Predicated region
    $region22: #{tpu_custom_call.1} parent=1 // pred_check
      _
    $region23: #{tpu_custom_call.1} parent=1 // pred_check_branch
      %305 = sbr.rel (0) target = $region25
    $region24: #{tpu_custom_call.1} parent=1 // pred_region
      %306 = dma.done [#allocation4], 256
    $region25: #{tpu_custom_call.1} parent=1 // pred_fallthru
      _
    %307 = vsyncpa [#allocation3], 1
    %308 = vsyncpa [#allocation6], 1
    %309 = vsyncpa [#allocation4], 1

</llo_original>
